<compile_context>
chip_gen: v7x
topology: tpu7x:2x2x1
jax: 0.10.0
libtpu: 0.0.40
codegen_flags: <defaults>
</compile_context>

<pallas_src>
import functools

import jax
import jax.numpy as jnp
from jax.experimental import pallas as pl
from jax.experimental.pallas import tpu as pltpu


def _round_up(x, m):
    return (x + m - 1) // m * m


def _blended_ordering_loss_kernel(x_ref, o_ref, *, batch, block_rows):
    """x_ref: (TB, 4) tile of [x0, x1, x2, x3]; o_ref: (1, 1) partial sum."""
    i = pl.program_id(0)
    xf = x_ref[...].astype(jnp.float32)          # (TB, 4), cast after DMA

    one = jnp.float32(1.0)
    x0 = xf[:, 0:1]
    x1 = xf[:, 1:2]
    x2 = xf[:, 2:3]
    x3 = xf[:, 3:4]

    # c0 = [1, x0, x1], c1 = [x0, x1, x2], c2 = [x1, x2, x3]
    d1a = (one - x0) ** 2
    d1b = (x0 - x1) ** 2
    d1c = (x1 - x2) ** 2
    d2a = (one - x1) ** 2
    d2b = (x0 - x2) ** 2
    d2c = (x1 - x3) ** 2

    def term(d1, d2):
        # literal formula (no algebraic fold) to match reference rounding
        return jnp.maximum(d1 - d2 + 0.5 * (d1 + d2), 0.0)

    per_row = term(d1a, d2a) + term(d1b, d2b) + term(d1c, d2c)   # (TB, 1)

    # Mask rows that are only padding (global row index >= batch).
    row = i * block_rows + jax.lax.broadcasted_iota(jnp.int32, per_row.shape, 0)
    per_row = jnp.where(row < batch, per_row, 0.0)

    o_ref[...] = jnp.sum(per_row, keepdims=True)                 # (1, 1)


def blended_ordering_loss(x, *, block_rows=1024):
    """x: (B, N) array with N >= 3 (matches the PyTorch module for N >= 3)."""
    b, n = x.shape
    if n < 3:
        # TODO(synk): N < 3 makes c[:,1]/c[:,2] come from the flipped unfold;
        # that degenerate branch is not implemented here.
        raise ValueError("blended_ordering_loss requires N >= 3")

    # Sublane packing of the input dtype (f32: 8, bf16: 16, int8/fp8: 32).
    pack = 8 * max(1, 4 // jnp.dtype(x.dtype).itemsize)
    tb = min(_round_up(block_rows, pack), _round_up(b, pack))
    num_tiles = pl.cdiv(b, tb)
    b_pad = num_tiles * tb

    # Only the first 4 columns are ever used; pad with zeros for N == 3
    # (that zero is exactly the module's trailing zero-pad) and pad rows up
    # to a whole number of tiles (masked out in-kernel).
    x4 = jnp.pad(x[:, :4], ((0, b_pad - b), (0, 4 - min(n, 4))))

    kernel = functools.partial(
        _blended_ordering_loss_kernel, batch=b, block_rows=tb)

    partials = pl.pallas_call(
        kernel,
        out_shape=jax.ShapeDtypeStruct((num_tiles, 1), jnp.float32),
        grid=(num_tiles,),
        in_specs=[pl.BlockSpec((tb, 4), lambda i: (i, 0))],
        out_specs=pl.BlockSpec((1, 1), lambda i: (i, 0)),
        compiler_params=pltpu.CompilerParams(
            dimension_semantics=("parallel",)),
    )(x4)

    # Tiny final reduction in the wrapper; mean over the (B, 3) tensor.
    return jnp.sum(partials) / jnp.float32(b * 3)


def _reference(x):
    """Pure-JAX mirror of the PyTorch forward (first three windows)."""
    b = x.shape[0]
    xp = jnp.concatenate(
        [jnp.ones((b, 1), x.dtype), x, jnp.zeros((b, 1), x.dtype)], axis=-1)
    c0, c1, c2 = xp[:, 0:3], xp[:, 1:4], xp[:, 2:5]
    diff1 = (c0 - c1) ** 2
    diff2 = (c0 - c2) ** 2
    return jnp.mean(jax.nn.relu(diff1 - diff2 + 0.5 * (diff1 + diff2)))


if __name__ == "__main__":
    key0, key1 = jax.random.split(jax.random.PRNGKey(0))

    # Case 1: small (batch, seq) input consistent with the module.
    B, N = 2, 8
    x = jax.random.normal(key0, (B, N), dtype=jnp.float32)
    loss = jax.block_until_ready(blended_ordering_loss(x))
    ref = jax.block_until_ready(_reference(x))
    if not jnp.allclose(loss, ref, rtol=1e-5, atol=1e-6):
        raise AssertionError(f"case1 mismatch: kernel={loss}, reference={ref}")

    # Case 2: exercises row masking (B not a tile multiple) and the N == 3 pad.
    B2, N2 = 37, 3
    x2 = jax.random.normal(key1, (B2, N2), dtype=jnp.float32)
    loss2 = jax.block_until_ready(blended_ordering_loss(x2))
    ref2 = jax.block_until_ready(_reference(x2))
    if not jnp.allclose(loss2, ref2, rtol=1e-5, atol=1e-6):
        raise AssertionError(f"case2 mismatch: kernel={loss2}, reference={ref2}")

    print("KERNEL_OK")
</pallas_src>

<mosaic_0001>
module attributes {stable_mosaic.version = 11 : i64} {
  func.func @_blended_ordering_loss_kernel(%arg0: i32, %arg1: memref<8x4xf32, #tpu.memory_space<vmem>>, %arg2: memref<1x1xf32, #tpu.memory_space<vmem>>) attributes {dimension_semantics = [#tpu.dimension_semantics<parallel>], iteration_bounds = array<i64: 1>, scalar_prefetch = 0 : i64, scratch_operands = 0 : i64, tpu.core_type = #tpu.core_type<tc>, window_params = [{transform_indices = @transform_0, window_bounds = array<i64: 8, 4>}, {transform_indices = @transform_1, window_bounds = array<i64: 1, 1>}]} {
    %c0 = arith.constant 0 : index
    %c0_0 = arith.constant 0 : index
    %0 = vector.load %arg1[%c0, %c0_0] : memref<8x4xf32, #tpu.memory_space<vmem>>, vector<8x4xf32>
    %1 = vector.extract_strided_slice %0 {offsets = [0, 0], sizes = [8, 1], strides = [1, 1]} : vector<8x4xf32> to vector<8x1xf32>
    %2 = vector.extract_strided_slice %0 {offsets = [0, 1], sizes = [8, 1], strides = [1, 1]} : vector<8x4xf32> to vector<8x1xf32>
    %3 = vector.extract_strided_slice %0 {offsets = [0, 2], sizes = [8, 1], strides = [1, 1]} : vector<8x4xf32> to vector<8x1xf32>
    %4 = vector.extract_strided_slice %0 {offsets = [0, 3], sizes = [8, 1], strides = [1, 1]} : vector<8x4xf32> to vector<8x1xf32>
    %cst = arith.constant 1.000000e+00 : f32
    %5 = vector.broadcast %cst : f32 to vector<8x1xf32>
    %6 = arith.subf %5, %1 : vector<8x1xf32>
    %7 = arith.mulf %6, %6 : vector<8x1xf32>
    %8 = arith.subf %1, %2 : vector<8x1xf32>
    %9 = arith.mulf %8, %8 : vector<8x1xf32>
    %10 = arith.subf %2, %3 : vector<8x1xf32>
    %11 = arith.mulf %10, %10 : vector<8x1xf32>
    %cst_1 = arith.constant 1.000000e+00 : f32
    %12 = vector.broadcast %cst_1 : f32 to vector<8x1xf32>
    %13 = arith.subf %12, %2 : vector<8x1xf32>
    %14 = arith.mulf %13, %13 : vector<8x1xf32>
    %15 = arith.subf %1, %3 : vector<8x1xf32>
    %16 = arith.mulf %15, %15 : vector<8x1xf32>
    %17 = arith.subf %2, %4 : vector<8x1xf32>
    %18 = arith.mulf %17, %17 : vector<8x1xf32>
    %19 = arith.subf %7, %14 : vector<8x1xf32>
    %20 = arith.addf %7, %14 : vector<8x1xf32>
    %cst_2 = arith.constant 5.000000e-01 : f32
    %21 = vector.broadcast %cst_2 : f32 to vector<8x1xf32>
    %22 = arith.mulf %21, %20 : vector<8x1xf32>
    %23 = arith.addf %19, %22 : vector<8x1xf32>
    %cst_3 = arith.constant 0.000000e+00 : f32
    %24 = vector.broadcast %cst_3 : f32 to vector<8x1xf32>
    %25 = arith.maximumf %23, %24 : vector<8x1xf32>
    %26 = arith.subf %9, %16 : vector<8x1xf32>
    %27 = arith.addf %9, %16 : vector<8x1xf32>
    %cst_4 = arith.constant 5.000000e-01 : f32
    %28 = vector.broadcast %cst_4 : f32 to vector<8x1xf32>
    %29 = arith.mulf %28, %27 : vector<8x1xf32>
    %30 = arith.addf %26, %29 : vector<8x1xf32>
    %cst_5 = arith.constant 0.000000e+00 : f32
    %31 = vector.broadcast %cst_5 : f32 to vector<8x1xf32>
    %32 = arith.maximumf %30, %31 : vector<8x1xf32>
    %33 = arith.addf %25, %32 : vector<8x1xf32>
    %34 = arith.subf %11, %18 : vector<8x1xf32>
    %35 = arith.addf %11, %18 : vector<8x1xf32>
    %cst_6 = arith.constant 5.000000e-01 : f32
    %36 = vector.broadcast %cst_6 : f32 to vector<8x1xf32>
    %37 = arith.mulf %36, %35 : vector<8x1xf32>
    %38 = arith.addf %34, %37 : vector<8x1xf32>
    %cst_7 = arith.constant 0.000000e+00 : f32
    %39 = vector.broadcast %cst_7 : f32 to vector<8x1xf32>
    %40 = arith.maximumf %38, %39 : vector<8x1xf32>
    %41 = arith.addf %33, %40 : vector<8x1xf32>
    %c8_i32 = arith.constant 8 : i32
    %42 = arith.muli %arg0, %c8_i32 : i32
    %43 = tpu.iota {dimensions = array<i32: 0>} : vector<8x1xi32>
    %44 = vector.broadcast %42 : i32 to vector<8x1xi32>
    %45 = arith.addi %44, %43 : vector<8x1xi32>
    %c2_i32 = arith.constant 2 : i32
    %46 = vector.broadcast %c2_i32 : i32 to vector<8x1xi32>
    %47 = arith.cmpi slt, %45, %46 : vector<8x1xi32>
    %cst_8 = arith.constant 0.000000e+00 : f32
    %48 = vector.broadcast %cst_8 : f32 to vector<8x1xf32>
    %49 = arith.select %47, %41, %48 : vector<8x1xi1>, vector<8x1xf32>
    %50 = vector.shape_cast %49 : vector<8x1xf32> to vector<1x8x1xf32>
    %cst_9 = arith.constant dense<0.000000e+00> : vector<1xf32>
    %51 = vector.multi_reduction <add>, %50, %cst_9 [1, 2] : vector<1x8x1xf32> to vector<1xf32>
    %52 = vector.shape_cast %51 : vector<1xf32> to vector<1x1x1xf32>
    %53 = vector.extract %52[0, 0, 0] : f32 from vector<1x1x1xf32>
    %54 = vector.broadcast %53 : f32 to vector<1x1xf32>
    %c0_10 = arith.constant 0 : index
    %c0_11 = arith.constant 0 : index
    %55 = vector.load %arg2[%c0_10, %c0_11] : memref<1x1xf32, #tpu.memory_space<vmem>>, vector<1x1xf32>
    tpu.vector_store %arg2[%c0_10, %c0_11], %54 {strides = array<i32>} : memref<1x1xf32, #tpu.memory_space<vmem>>, vector<1x1xf32>,
    return
  }
  func.func @transform_0(%arg0: i32) -> (i32, i32) {
    %c0_i32 = arith.constant 0 : i32
    %c0_i32_0 = arith.constant 0 : i32
    return %arg0, %c0_i32 : i32, i32
  }
  func.func @transform_1(%arg0: i32) -> (i32, i32) {
    %c0_i32 = arith.constant 0 : i32
    %c0_i32_0 = arith.constant 0 : i32
    return %arg0, %c0_i32 : i32, i32
  }
}

</mosaic_0001>

<llo_original>
// kernel: tpu_custom_call.1
$region0: #{tpu_custom_call.1}
  #allocation0 [shape = 'u32[]', space=smem, size = 0x4, offset = 0x4, fixed_abs, tag = 'smem constant byte address 0x4 - core index']
  #allocation1 [shape = 'u32[144,128]{1,0:T(1,128)}', space=vmem, size = 0x12000, scoped, tag = 'internal scratch']
  %s0 = inlined_call_operand.vmem [shape: f32[8,4], index: 0, kind: input, shape index: {}]
  %s1 = inlined_call_operand.hbm [shape: f32[1,1], index: 1, kind: output, shape index: {}]
  %s2 = sld [smem:[#allocation0]]
  $region14: #{tpu_custom_call.1} parent=0
    _
  %s4 = ssub.s32 1, %s2
  %s5 = scalar_select 0, %s4, %s2
  $region1: #{tpu_custom_call.1} parent=0
    #allocation2 [shape = 'u8[512]{0}', space=vmem, size = 0x400, scoped, tag = 'output window, operand 0, single buffered']
    #allocation3 [shape = 's32[1]{0}', space=sflag, size = 0x4, scoped, tag = 'scoped memory for tpu_custom_call.1']
    %6 = vsyncpa [#allocation3], 0
    // Predicated region
    $region2: #{tpu_custom_call.1} parent=1 // pred_check
      _
    $region3: #{tpu_custom_call.1} parent=1 // pred_check_branch
      %8 = sbr.rel (0) target = $region5
    $region4: #{tpu_custom_call.1} parent=1 // pred_region
      _
    $region5: #{tpu_custom_call.1} parent=1 // pred_fallthru
      _
    %v9 = vld [vmem:[%s0] sm:$0xff]
    %v10 = vsub.f32 1.0, %v9
    %v11 = vmul.f32 %v10, %v10
    %13 = vrot.lane.b32.xlu0 %v9, 127
    %v14 = vpop.permute.xlu0 %13
    %v16 = vsub.f32 %v9, %v14
    %v17 = vmul.f32 %v16, %v16
    %18 = vrot.lane.b32.xlu0 %v9, 126
    %v19 = vpop.permute.xlu0 %18
    %v21 = vsub.f32 %v9, %v19
    %v22 = vmul.f32 %v21, %v21
    %24 = vrot.lane.b32.xlu0 %v11, 127
    %v25 = vpop.permute.xlu0 %24
    %v27 = vsub.f32 %v11, %v25
    %v28 = vadd.f32 %v11, %v25
    %v29 = vmul.f32 %v28, 0.5
    %v30 = vadd.f32 %v27, %v29
    %v31 = vmax.f32 %v30, 0.0
    %v32 = vsub.f32 %v17, %v22
    %v33 = vadd.f32 %v17, %v22
    %v34 = vmul.f32 %v33, 0.5
    %v35 = vadd.f32 %v32, %v34
    %v36 = vmax.f32 %v35, 0.0
    %v37 = vadd.f32 %v31, %v36
    %39 = vrot.lane.b32.xlu0 %v36, 127
    %v40 = vpop.permute.xlu0 %39
    %v42 = vadd.f32 %v37, %v40
    %s43 = smul.u32 0, 8
    %v44 = vlaneseq
    %v45 = vshrl.u32 %v44, 7
    %v46 = vstv %s43
    %v47 = vadd.s32 %v46, %v45
    %vm48 = vcmp.lt.s32.totalorder %v47, 2
    %v49 = vsel %vm48, %v42, 0.0
    %vm50 = vcmask 7168
    %v51 = vsel %vm50, %v49, 0.0
    %52 = vadd.xlane.f32.xlu0 %v51
    %v53 = vpop.xlane.xlu0 %52
    %v54 = vrot.slane %v53, 4
    %v55 = vadd.f32 %v53, %v54
    %v56 = vrot.slane %v55, 2
    %v57 = vadd.f32 %v55, %v56
    %v58 = vrot.slane %v57, 1
    %v59 = vadd.f32 %v57, %v58
    %s60 = vtos %v59
    %v61 = vstv %s60
    %vm62 = vcmask 0
    %63 = vst.msk [vmem:[#allocation2] sm:$0x1] %vm62, %v61
    // Predicated region
    $region6: #{tpu_custom_call.1} parent=1 // pred_check
      _
    $region7: #{tpu_custom_call.1} parent=1 // pred_check_branch
      %65 = sbr.rel (0) target = $region9
    $region8: #{tpu_custom_call.1} parent=1 // pred_region
      %s67 = ssub.s32 16, 16
      %68 = vsyncadd [#allocation3], %s67
      %s70 = sshll.u32 [#allocation2], 4
      %s71 = int_to_ptr.vmem [resolvable:$true] %s70
      %73 = dma.vmem_to_hbm [thread:$0]  %s71, 16, %s1, [#allocation3]
    $region9: #{tpu_custom_call.1} parent=1 // pred_fallthru
      _
    // Predicated region
    $region10: #{tpu_custom_call.1} parent=1 // pred_check
      _
    $region11: #{tpu_custom_call.1} parent=1 // pred_check_branch
      %75 = sbr.rel (0) target = $region13
    $region12: #{tpu_custom_call.1} parent=1 // pred_region
      %76 = dma.done [#allocation3], 16
    $region13: #{tpu_custom_call.1} parent=1 // pred_fallthru
      _
    %77 = vsyncpa [#allocation3], 1

</llo_original>
